<compile_context>
chip_gen: v6e
topology: v6e:2x2x1
jax: 0.10.0
libtpu: 0.0.40
codegen_flags: <defaults>
</compile_context>

<pallas_src>
import functools

import jax
import jax.numpy as jnp
from jax.experimental import pallas as pl
from jax.experimental.pallas import tpu as pltpu


def _ce_kernel(logits_ref, targets_ref, out_ref, *, n_rows, c, pack):
    """One (TILE_R, pack*C) tile: writes this tile's partial sum of
    [logsumexp(row) - row[target]] over its valid packed rows."""
    i = pl.program_id(0)

    x = logits_ref[...].astype(jnp.float32)              # (tr, w) upcast in-kernel
    tgt = targets_ref[...]                                 # (tr, pack) int32
    tr, w = x.shape

    # Ragged last tile: packed rows at/after n_rows hold undefined data.  Since
    # `pack` divides N exactly, validity is per PACKED row -> cheap (tr, 1)
    # mask, applied BEFORE the max/exp so garbage (Inf/NaN) never propagates.
    row_ids = i * tr + jax.lax.broadcasted_iota(jnp.int32, (tr, 1), 0)
    row_valid = row_ids < n_rows
    x = jnp.where(row_valid, x, 0.0)

    # Shared max over all `pack` sub-rows of a packed row: m >= every sub-row's
    # own max, so exp(x - m) <= 1 and each sub-row's logsumexp stays exact.
    m = jnp.max(x, axis=-1, keepdims=True)                  # (tr, 1)
    e = jnp.exp(x - m)                                       # (tr, w)

    lane_f = jax.lax.broadcasted_iota(jnp.int32, (tr, w), 1).astype(jnp.float32)

    if pack == 1:
        # Unpacked fallback (C > 64 or N indivisible): plain per-row path.
        sum_e = jnp.sum(e, axis=-1, keepdims=True)           # (tr, 1)
        tgt_rep = tgt.astype(jnp.float32)                     # (tr, 1) broadcasts
    else:
        # Tiny constant 0/1 segment matrices built from iota + compares
        # (avoids vector integer division).  seg(l) = l // c without a div.
        l_wp = jax.lax.broadcasted_iota(jnp.int32, (w, pack), 0)
        k_wp = jax.lax.broadcasted_iota(jnp.int32, (w, pack), 1)
        seg_wp = ((l_wp >= k_wp * c) & (l_wp < (k_wp + 1) * c)).astype(jnp.float32)
        l_pw = jax.lax.broadcasted_iota(jnp.int32, (pack, w), 1)
        k_pw = jax.lax.broadcasted_iota(jnp.int32, (pack, w), 0)
        seg_pw = ((l_pw >= k_pw * c) & (l_pw < (k_pw + 1) * c)).astype(jnp.float32)

        # Per-sub-row sum of exp on the otherwise-idle MXU: (tr,w) @ (w,pack).
        sum_e = jnp.dot(e, seg_wp, preferred_element_type=jnp.float32)

        # Spread each sub-row's target *lane* (k*c + target) across its c lanes.
        tgt_lane = (tgt + jax.lax.broadcasted_iota(jnp.int32, (tr, pack), 1) * c
                    ).astype(jnp.float32)
        tgt_rep = jnp.dot(tgt_lane, seg_pw, preferred_element_type=jnp.float32)

    lse = m + jnp.log(sum_e)                                  # (tr, pack)
    lse_sum = jnp.sum(jnp.where(row_valid, lse, 0.0))

    # Target-logit gather via compare+select against the lane iota.  Invalid
    # rows already have x == 0, so garbage targets contribute nothing.
    tgt_sum = jnp.sum(jnp.where(lane_f == tgt_rep, x, 0.0))

    partial = lse_sum - tgt_sum

    # Lane-/sublane-aligned (8, 128) output block; only [0, 0] carries data so
    # the wrapper can simply jnp.sum() the whole partials array.
    s_idx = jax.lax.broadcasted_iota(jnp.int32, (8, 128), 0)
    l_idx = jax.lax.broadcasted_iota(jnp.int32, (8, 128), 1)
    out_ref[...] = jnp.where((s_idx == 0) & (l_idx == 0), partial, 0.0)


def _vmem_capacity_bytes():
    try:
        return int(pltpu.get_tpu_info().vmem_capacity_bytes)
    except Exception:
        return 64 * 1024 * 1024          # conservative (v7x physical VMEM)


def _choose_pack(n, c):
    """Largest power-of-two pack <= 128//C that divides N (no pad copy ever),
    capped so the (pack, w) helper matrices stay tiny."""
    max_pack = min(max(1, 128 // c), 16)
    pack = 1
    while pack * 2 <= max_pack and n % (pack * 2) == 0:
        pack *= 2
    return pack


def _choose_tile_rows(n_rows, w, itemsize):
    """Row-tile size (in packed rows): ~2 MiB of logits HBM bytes per grid step
    (amortizes the ~0.35 us per-step overhead; v5e saturates DMA well below
    this), bounded by a generation-aware VMEM working-set budget that accounts
    for lane padding, double buffering, f32 upcast temporaries and the
    lane-padded targets block."""
    hbm_target = 2 * 1024 * 1024
    t_hbm = max(1, hbm_target // max(1, w * itemsize))

    budget = min(_vmem_capacity_bytes() // 4, 20 * 1024 * 1024)
    w_pad = -(-w // 128) * 128
    # logits: 2 buffers native dtype; ~3 full-width f32 temporaries in-kernel;
    # targets: (tile, pack) int32 lane-pads to 128 lanes, 2 buffers.
    bytes_per_row = w_pad * (2 * itemsize + 3 * 4) + 128 * 4 * 2
    t_vmem = max(1, budget // bytes_per_row)

    t = min(t_hbm, t_vmem)
    t = max(16, (t // 16) * 16)
    if t >= n_rows:
        return n_rows                     # single full-extent block
    return t


def cross_entropy_loss(predictions, targets, reduction="mean", tile_rows=None):
    """predictions: (B, S, C) float; targets: (B, S) int.

    Matches torch.nn.CrossEntropyLoss(reduction=...) on the flattened
    (B*S, C) / (B*S,) views.
    """
    if reduction not in ("mean", "sum"):
        # TODO(synk): reduction='none' needs an (N,)-shaped output; only
        # 'mean' (the module default) and 'sum' are implemented.
        raise ValueError(f"unsupported reduction: {reduction}")
    # TODO(synk): ignore_index is not supported (the wrapper never sets it);
    # targets are assumed to be in [0, C).

    b, s, c = predictions.shape
    n = b * s
    logits_flat = predictions.reshape(n, c)                # native dtype
    targets_flat = targets.reshape(n).astype(jnp.int32)

    # Lane packing: pure layout plumbing (contiguous reshape), no data pass.
    pack = _choose_pack(n, c)
    n_rows = n // pack
    w = pack * c
    logits_packed = logits_flat.reshape(n_rows, w)
    targets_packed = targets_flat.reshape(n_rows, pack)

    if tile_rows is None:
        tile_rows = _choose_tile_rows(n_rows, w, logits_packed.dtype.itemsize)
    grid_n = pl.cdiv(n_rows, tile_rows)

    kernel = functools.partial(_ce_kernel, n_rows=n_rows, c=c, pack=pack)

    vmem_limit = min(_vmem_capacity_bytes() // 2, 64 * 1024 * 1024)

    partials = pl.pallas_call(
        kernel,
        out_shape=jax.ShapeDtypeStruct((grid_n * 8, 128), jnp.float32),
        grid=(grid_n,),
        in_specs=[
            # Class/pack dim is last (lane axis); full width per block.
            # TODO(synk): vocab-scale C would need C-tiling + online logsumexp.
            pl.BlockSpec((tile_rows, w), lambda i: (i, 0)),      # packed logits
            pl.BlockSpec((tile_rows, pack), lambda i: (i, 0)),   # packed targets
        ],
        # One (8,128) partial-sum block per grid step -> no resident
        # accumulator, so the row-tile axis can be megacore-parallel on v7x.
        out_specs=pl.BlockSpec((8, 128), lambda i: (i, 0)),
        compiler_params=pltpu.CompilerParams(
            dimension_semantics=("parallel",),
            vmem_limit_bytes=int(vmem_limit),
        ),
    )(logits_packed, targets_packed)

    total = jnp.sum(partials)            # tiny cross-tile reduction in XLA
    if reduction == "mean":
        return total / jnp.float32(n)
    return total


def _reference(predictions, targets):
    logits = predictions.reshape(-1, predictions.shape[-1]).astype(jnp.float32)
    tgt = targets.reshape(-1)
    return jnp.mean(
        jax.nn.logsumexp(logits, axis=-1)
        - jnp.take_along_axis(logits, tgt[:, None], axis=-1)[:, 0])


if __name__ == "__main__":
    key = jax.random.PRNGKey(0)
    k_pred, k_tgt, k_pred2, k_tgt2 = jax.random.split(key, 4)

    # --- shape implied by the module: batch=2, seq=8, n_cats=32 ---
    batch, seq_len, n_cats = 2, 8, 32
    predictions = jax.random.normal(k_pred, (batch, seq_len, n_cats),
                                    dtype=jnp.float32)
    targets = jax.random.randint(k_tgt, (batch, seq_len), 0, n_cats,
                                 dtype=jnp.int32)

    loss = cross_entropy_loss(predictions, targets, reduction="mean")
    jax.block_until_ready(loss)
    ref = _reference(predictions, targets)
    assert jnp.allclose(loss, ref, rtol=1e-5, atol=1e-5), (loss, ref)

    # --- reduction='sum' path ---
    loss_sum = cross_entropy_loss(predictions, targets, reduction="sum")
    jax.block_until_ready(loss_sum)
    n_tot = batch * seq_len
    assert jnp.allclose(loss_sum, ref * n_tot, rtol=1e-5, atol=1e-4), \
        (loss_sum, ref * n_tot)

    # --- bf16 logits: native-dtype DMA + in-kernel upcast path ---
    pred_bf16 = predictions.astype(jnp.bfloat16)
    loss_bf16 = cross_entropy_loss(pred_bf16, targets, reduction="mean")
    jax.block_until_ready(loss_bf16)
    ref_bf16 = _reference(pred_bf16.astype(jnp.float32), targets)
    assert jnp.allclose(loss_bf16, ref_bf16, rtol=1e-4, atol=1e-4), \
        (loss_bf16, ref_bf16)

    # --- multi-tile grid with a ragged last row-tile (pack=2, masking) ---
    b2, s2 = 3, 50                        # N = 150 -> pack=2, 75 packed rows
    pred2 = jax.random.normal(k_pred2, (b2, s2, n_cats), dtype=jnp.float32)
    tgt2 = jax.random.randint(k_tgt2, (b2, s2), 0, n_cats, dtype=jnp.int32)
    loss2 = cross_entropy_loss(pred2, tgt2, reduction="mean", tile_rows=32)
    jax.block_until_ready(loss2)
    ref2 = _reference(pred2, tgt2)
    assert jnp.allclose(loss2, ref2, rtol=1e-5, atol=1e-5), (loss2, ref2)

    print("KERNEL_OK")
</pallas_src>

<mosaic_0001>
module attributes {stable_mosaic.version = 11 : i64} {
  func.func @_ce_kernel(%arg0: i32, %arg1: memref<4x128xf32, #tpu.memory_space<vmem>>, %arg2: memref<4x4xi32, #tpu.memory_space<vmem>>, %arg3: memref<8x128xf32, #tpu.memory_space<vmem>>) attributes {dimension_semantics = [#tpu.dimension_semantics<parallel>], iteration_bounds = array<i64: 1>, scalar_prefetch = 0 : i64, scratch_operands = 0 : i64, tpu.core_type = #tpu.core_type<tc>, window_params = [{transform_indices = @transform_0, window_bounds = array<i64: 4, 128>}, {transform_indices = @transform_1, window_bounds = array<i64: 4, 4>}, {transform_indices = @transform_2, window_bounds = array<i64: 8, 128>}]} {
    %c0 = arith.constant 0 : index
    %c0_0 = arith.constant 0 : index
    %0 = vector.load %arg1[%c0, %c0_0] : memref<4x128xf32, #tpu.memory_space<vmem>>, vector<4x128xf32>
    %c0_1 = arith.constant 0 : index
    %c0_2 = arith.constant 0 : index
    %1 = vector.load %arg2[%c0_1, %c0_2] : memref<4x4xi32, #tpu.memory_space<vmem>>, vector<4x4xi32>
    %c4_i32 = arith.constant 4 : i32
    %2 = arith.muli %arg0, %c4_i32 : i32
    %3 = tpu.iota {dimensions = array<i32: 0>} : vector<4x1xi32>
    %4 = vector.broadcast %2 : i32 to vector<4x1xi32>
    %5 = arith.addi %4, %3 : vector<4x1xi32>
    %c4_i32_3 = arith.constant 4 : i32
    %6 = vector.broadcast %c4_i32_3 : i32 to vector<4x1xi32>
    %7 = arith.cmpi slt, %5, %6 : vector<4x1xi32>
    %cst = arith.constant 0.000000e+00 : f32
    %8 = vector.shape_cast %7 : vector<4x1xi1> to vector<4x1xi1>
    %9 = vector.broadcast %8 : vector<4x1xi1> to vector<4x128xi1>
    %10 = vector.broadcast %cst : f32 to vector<4x128xf32>
    %11 = arith.select %9, %0, %10 : vector<4x128xi1>, vector<4x128xf32>
    %cst_4 = arith.constant dense<0xFF800000> : vector<4xf32>
    %12 = vector.multi_reduction <maximumf>, %11, %cst_4 [1] : vector<4x128xf32> to vector<4xf32>
    %13 = vector.shape_cast %12 : vector<4xf32> to vector<4x1xf32>
    %14 = vector.broadcast %13 : vector<4x1xf32> to vector<4x128xf32>
    %15 = arith.subf %11, %14 : vector<4x128xf32>
    %16 = math.exp %15 : vector<4x128xf32>
    %17 = tpu.iota {dimensions = array<i32: 1>} : vector<4x128xi32>
    %18 = arith.sitofp %17 : vector<4x128xi32> to vector<4x128xf32>
    %19 = tpu.iota {dimensions = array<i32: 0>} : vector<128x4xi32>
    %20 = tpu.iota {dimensions = array<i32: 1>} : vector<128x4xi32>
    %c32_i32 = arith.constant 32 : i32
    %21 = vector.broadcast %c32_i32 : i32 to vector<128x4xi32>
    %22 = arith.muli %20, %21 : vector<128x4xi32>
    %23 = arith.cmpi sge, %19, %22 : vector<128x4xi32>
    %c1_i32 = arith.constant 1 : i32
    %24 = vector.broadcast %c1_i32 : i32 to vector<128x4xi32>
    %25 = arith.addi %20, %24 : vector<128x4xi32>
    %c32_i32_5 = arith.constant 32 : i32
    %26 = vector.broadcast %c32_i32_5 : i32 to vector<128x4xi32>
    %27 = arith.muli %25, %26 : vector<128x4xi32>
    %28 = arith.cmpi slt, %19, %27 : vector<128x4xi32>
    %29 = arith.andi %23, %28 : vector<128x4xi1>
    %30 = arith.extui %29 : vector<128x4xi1> to vector<128x4xi32>
    %31 = arith.sitofp %30 : vector<128x4xi32> to vector<128x4xf32>
    %32 = tpu.iota {dimensions = array<i32: 1>} : vector<4x128xi32>
    %33 = tpu.iota {dimensions = array<i32: 0>} : vector<4x128xi32>
    %c32_i32_6 = arith.constant 32 : i32
    %34 = vector.broadcast %c32_i32_6 : i32 to vector<4x128xi32>
    %35 = arith.muli %33, %34 : vector<4x128xi32>
    %36 = arith.cmpi sge, %32, %35 : vector<4x128xi32>
    %c1_i32_7 = arith.constant 1 : i32
    %37 = vector.broadcast %c1_i32_7 : i32 to vector<4x128xi32>
    %38 = arith.addi %33, %37 : vector<4x128xi32>
    %c32_i32_8 = arith.constant 32 : i32
    %39 = vector.broadcast %c32_i32_8 : i32 to vector<4x128xi32>
    %40 = arith.muli %38, %39 : vector<4x128xi32>
    %41 = arith.cmpi slt, %32, %40 : vector<4x128xi32>
    %42 = arith.andi %36, %41 : vector<4x128xi1>
    %43 = arith.extui %42 : vector<4x128xi1> to vector<4x128xi32>
    %44 = arith.sitofp %43 : vector<4x128xi32> to vector<4x128xf32>
    %cst_9 = arith.constant dense<0.000000e+00> : vector<4x4xf32>
    %45 = tpu.matmul %16, %31, %cst_9 {dimension_numbers = #tpu.dot_dimension_numbers<[1], [0], [0], [1], [0, 0, 1, 1], [], []>} : vector<4x128xf32>, vector<128x4xf32>, vector<4x4xf32> -> vector<4x4xf32>
    %46 = tpu.iota {dimensions = array<i32: 1>} : vector<4x4xi32>
    %c32_i32_10 = arith.constant 32 : i32
    %47 = vector.broadcast %c32_i32_10 : i32 to vector<4x4xi32>
    %48 = arith.muli %46, %47 : vector<4x4xi32>
    %49 = arith.addi %1, %48 : vector<4x4xi32>
    %50 = arith.sitofp %49 : vector<4x4xi32> to vector<4x4xf32>
    %cst_11 = arith.constant dense<0.000000e+00> : vector<4x128xf32>
    %51 = tpu.matmul %50, %44, %cst_11 {dimension_numbers = #tpu.dot_dimension_numbers<[1], [0], [0], [1], [0, 0, 1, 1], [], []>} : vector<4x4xf32>, vector<4x128xf32>, vector<4x128xf32> -> vector<4x128xf32>
    %52 = math.log %45 : vector<4x4xf32>
    %53 = vector.broadcast %13 : vector<4x1xf32> to vector<4x4xf32>
    %54 = arith.addf %53, %52 : vector<4x4xf32>
    %cst_12 = arith.constant 0.000000e+00 : f32
    %55 = vector.shape_cast %7 : vector<4x1xi1> to vector<4x1xi1>
    %56 = vector.broadcast %55 : vector<4x1xi1> to vector<4x4xi1>
    %57 = vector.broadcast %cst_12 : f32 to vector<4x4xf32>
    %58 = arith.select %56, %54, %57 : vector<4x4xi1>, vector<4x4xf32>
    %59 = vector.shape_cast %58 : vector<4x4xf32> to vector<1x4x4xf32>
    %cst_13 = arith.constant dense<0.000000e+00> : vector<1xf32>
    %60 = vector.multi_reduction <add>, %59, %cst_13 [1, 2] : vector<1x4x4xf32> to vector<1xf32>
    %61 = vector.shape_cast %60 : vector<1xf32> to vector<1x1x1xf32>
    %62 = vector.extract %61[0, 0, 0] : f32 from vector<1x1x1xf32>
    %63 = arith.cmpf oeq, %18, %51 : vector<4x128xf32>
    %cst_14 = arith.constant 0.000000e+00 : f32
    %64 = vector.broadcast %cst_14 : f32 to vector<4x128xf32>
    %65 = arith.select %63, %11, %64 : vector<4x128xi1>, vector<4x128xf32>
    %66 = vector.shape_cast %65 : vector<4x128xf32> to vector<1x4x128xf32>
    %cst_15 = arith.constant dense<0.000000e+00> : vector<1xf32>
    %67 = vector.multi_reduction <add>, %66, %cst_15 [1, 2] : vector<1x4x128xf32> to vector<1xf32>
    %68 = vector.shape_cast %67 : vector<1xf32> to vector<1x1x1xf32>
    %69 = vector.extract %68[0, 0, 0] : f32 from vector<1x1x1xf32>
    %70 = arith.subf %62, %69 : f32
    %71 = tpu.iota {dimensions = array<i32: 0>} : vector<8x128xi32>
    %72 = tpu.iota {dimensions = array<i32: 1>} : vector<8x128xi32>
    %c0_i32 = arith.constant 0 : i32
    %73 = vector.broadcast %c0_i32 : i32 to vector<8x128xi32>
    %74 = arith.cmpi eq, %71, %73 : vector<8x128xi32>
    %c0_i32_16 = arith.constant 0 : i32
    %75 = vector.broadcast %c0_i32_16 : i32 to vector<8x128xi32>
    %76 = arith.cmpi eq, %72, %75 : vector<8x128xi32>
    %77 = arith.andi %74, %76 : vector<8x128xi1>
    %cst_17 = arith.constant 0.000000e+00 : f32
    %78 = vector.broadcast %70 : f32 to vector<8x128xf32>
    %79 = vector.broadcast %cst_17 : f32 to vector<8x128xf32>
    %80 = arith.select %77, %78, %79 : vector<8x128xi1>, vector<8x128xf32>
    %c0_18 = arith.constant 0 : index
    %c0_19 = arith.constant 0 : index
    %81 = vector.load %arg3[%c0_18, %c0_19] : memref<8x128xf32, #tpu.memory_space<vmem>>, vector<8x128xf32>
    tpu.vector_store %arg3[%c0_18, %c0_19], %80 {strides = array<i32>} : memref<8x128xf32, #tpu.memory_space<vmem>>, vector<8x128xf32>,
    return
  }
  func.func @transform_0(%arg0: i32) -> (i32, i32) {
    %c0_i32 = arith.constant 0 : i32
    %c0_i32_0 = arith.constant 0 : i32
    return %arg0, %c0_i32 : i32, i32
  }
  func.func @transform_1(%arg0: i32) -> (i32, i32) {
    %c0_i32 = arith.constant 0 : i32
    %c0_i32_0 = arith.constant 0 : i32
    return %arg0, %c0_i32 : i32, i32
  }
  func.func @transform_2(%arg0: i32) -> (i32, i32) {
    %c0_i32 = arith.constant 0 : i32
    %c0_i32_0 = arith.constant 0 : i32
    return %arg0, %c0_i32 : i32, i32
  }
}

</mosaic_0001>

<llo_original>
// kernel: tpu_custom_call.1
$region0: #{tpu_custom_call.1}
  #allocation0 [shape = 'u32[]', space=smem, size = 0x4, offset = 0x4, fixed_abs, tag = 'smem constant byte address 0x4 - core index']
  #allocation1 [shape = 'u32[144,128]{1,0:T(1,128)}', space=vmem, size = 0x12000, scoped, tag = 'internal scratch']
  %s0 = inlined_call_operand.hbm [shape: f32[4,128], index: 0, kind: input, shape index: {}]
  %s1 = inlined_call_operand.hbm [shape: s32[4,4], index: 1, kind: input, shape index: {}]
  %s2 = inlined_call_operand.hbm [shape: f32[8,128], index: 2, kind: output, shape index: {}]
  %s3 = sld [smem:[#allocation0]]
  $region26: #{tpu_custom_call.1} parent=0
    _
  %s5 = ssub.s32 1, %s3
  %s6 = scalar_select 0, %s5, %s3
  $region1: #{tpu_custom_call.1} parent=0
    #allocation2 [shape = 'u8[2048]{0}', space=vmem, size = 0x800, scoped, tag = 'input window, operand 0, single buffered']
    #allocation3 [shape = 's32[1]{0}', space=sflag, size = 0x4, scoped, tag = 'scoped memory for tpu_custom_call.1']
    #allocation4 [shape = 's32[1]{0}', space=sflag, size = 0x4, scoped, tag = 'scoped memory for tpu_custom_call.1']
    #allocation5 [shape = 'u8[2048]{0}', space=vmem, size = 0x800, scoped, tag = 'input window, operand 1, single buffered']
    #allocation6 [shape = 's32[1]{0}', space=sflag, size = 0x4, scoped, tag = 'scoped memory for tpu_custom_call.1']
    #allocation7 [shape = 'u8[4096]{0}', space=vmem, size = 0x1000, scoped, tag = 'output window, operand 0, single buffered']
    %7 = vsyncpa [#allocation3], 0
    %8 = vsyncpa [#allocation6], 0
    %9 = vsyncpa [#allocation4], 0
    // Predicated region
    $region2: #{tpu_custom_call.1} parent=1 // pred_check
      _
    $region3: #{tpu_custom_call.1} parent=1 // pred_check_branch
      %11 = sbr.rel (0) target = $region5
    $region4: #{tpu_custom_call.1} parent=1 // pred_region
      %s13 = ssub.s32 64, 64
      %14 = vsyncadd [#allocation3], %s13
      %s16 = sshll.u32 [#allocation2], 4
      %s17 = int_to_ptr.vmem [resolvable:$true] %s16
      %19 = dma.hbm_to_vmem [thread:$0]  %s0, 64, %s17, [#allocation3]
    $region5: #{tpu_custom_call.1} parent=1 // pred_fallthru
      _
    // Predicated region
    $region6: #{tpu_custom_call.1} parent=1 // pred_check
      _
    $region7: #{tpu_custom_call.1} parent=1 // pred_check_branch
      %21 = sbr.rel (0) target = $region9
    $region8: #{tpu_custom_call.1} parent=1 // pred_region
      %s23 = ssub.s32 64, 64
      %24 = vsyncadd [#allocation6], %s23
      %s26 = sshll.u32 [#allocation5], 4
      %s27 = int_to_ptr.vmem [resolvable:$true] %s26
      %29 = dma.hbm_to_vmem [thread:$0]  %s1, 64, %s27, [#allocation6]
    $region9: #{tpu_custom_call.1} parent=1 // pred_fallthru
      _
    // Predicated region
    $region10: #{tpu_custom_call.1} parent=1 // pred_check
      _
    $region11: #{tpu_custom_call.1} parent=1 // pred_check_branch
      %31 = sbr.rel (0) target = $region13
    $region12: #{tpu_custom_call.1} parent=1 // pred_region
      %32 = dma.done [#allocation3], 64
    $region13: #{tpu_custom_call.1} parent=1 // pred_fallthru
      _
    // Predicated region
    $region14: #{tpu_custom_call.1} parent=1 // pred_check
      _
    $region15: #{tpu_custom_call.1} parent=1 // pred_check_branch
      %34 = sbr.rel (0) target = $region17
    $region16: #{tpu_custom_call.1} parent=1 // pred_region
      %35 = dma.done [#allocation6], 64
    $region17: #{tpu_custom_call.1} parent=1 // pred_fallthru
      _
    %v36 = vld [vmem:[#allocation2] sm:$0xf]
    %v37 = vld [vmem:[#allocation5] sm:$0xf]
    %s38 = smul.u32 0, 4
    %v39 = vlaneseq
    %v40 = vshrl.u32 %v39, 7
    %v41 = vstv %s38
    %v42 = vadd.s32 %v41, %v40
    %vm43 = vcmp.lt.s32.totalorder %v42, 4
    %v44 = vsel %vm43, 1, 0
    %vm45 = vcmp.eq.s32.totalorder %v44, 1
    %v46 = vsel %vm45, %v36, 0.0
    %vm47 = vcmask 1043456
    %v48 = vsel %vm47, %v46, -inf
    %49 = vmax.xlane.f32.xlu0 %v48
    %v50 = vpop.xlane.xlu0 %49
    %v51 = vsub.f32 %v46, %v50
    %v52 = vmul.f32 %v51, 1.442695
    %v53 = vpow.pop %v52
    %v54 = vlaneseq
    %v55 = vand.u32 %v54, 127
    %v56 = vcvt.s32.f32 %v55
    %v57 = vadd.s32 %v40, 8
    %v58 = vadd.s32 %v40, 16
    %v59 = vadd.s32 %v40, 24
    %v60 = vadd.s32 %v40, 32
    %v61 = vadd.s32 %v40, 40
    %v62 = vadd.s32 %v40, 48
    %v63 = vadd.s32 %v40, 56
    %v64 = vadd.s32 %v40, 64
    %v65 = vadd.s32 %v40, 72
    %v66 = vadd.s32 %v40, 80
    %v67 = vadd.s32 %v40, 88
    %v68 = vadd.s32 %v40, 96
    %v69 = vadd.s32 %v40, 104
    %v70 = vadd.s32 %v40, 112
    %v71 = vadd.s32 %v40, 120
    %v72 = vmul.u32 %v55, 32
    %vm73 = vcmp.ge.s32.totalorder %v40, %v72
    %vm74 = vcmp.ge.s32.totalorder %v57, %v72
    %vm75 = vcmp.ge.s32.totalorder %v58, %v72
    %vm76 = vcmp.ge.s32.totalorder %v59, %v72
    %vm77 = vcmp.ge.s32.totalorder %v60, %v72
    %vm78 = vcmp.ge.s32.totalorder %v61, %v72
    %vm79 = vcmp.ge.s32.totalorder %v62, %v72
    %vm80 = vcmp.ge.s32.totalorder %v63, %v72
    %vm81 = vcmp.ge.s32.totalorder %v64, %v72
    %vm82 = vcmp.ge.s32.totalorder %v65, %v72
    %vm83 = vcmp.ge.s32.totalorder %v66, %v72
    %vm84 = vcmp.ge.s32.totalorder %v67, %v72
    %vm85 = vcmp.ge.s32.totalorder %v68, %v72
    %vm86 = vcmp.ge.s32.totalorder %v69, %v72
    %vm87 = vcmp.ge.s32.totalorder %v70, %v72
    %vm88 = vcmp.ge.s32.totalorder %v71, %v72
    %v89 = vadd.s32 %v55, 1
    %v90 = vmul.u32 %v89, 32
    %vm91 = vcmp.lt.s32.totalorder %v40, %v90
    %vm92 = vcmp.lt.s32.totalorder %v57, %v90
    %vm93 = vcmp.lt.s32.totalorder %v58, %v90
    %vm94 = vcmp.lt.s32.totalorder %v59, %v90
    %vm95 = vcmp.lt.s32.totalorder %v60, %v90
    %vm96 = vcmp.lt.s32.totalorder %v61, %v90
    %vm97 = vcmp.lt.s32.totalorder %v62, %v90
    %vm98 = vcmp.lt.s32.totalorder %v63, %v90
    %vm99 = vcmp.lt.s32.totalorder %v64, %v90
    %vm100 = vcmp.lt.s32.totalorder %v65, %v90
    %vm101 = vcmp.lt.s32.totalorder %v66, %v90
    %vm102 = vcmp.lt.s32.totalorder %v67, %v90
    %vm103 = vcmp.lt.s32.totalorder %v68, %v90
    %vm104 = vcmp.lt.s32.totalorder %v69, %v90
    %vm105 = vcmp.lt.s32.totalorder %v70, %v90
    %vm106 = vcmp.lt.s32.totalorder %v71, %v90
    %vm107 = vmand %vm73, %vm91
    %vm108 = vmand %vm74, %vm92
    %vm109 = vmand %vm75, %vm93
    %vm110 = vmand %vm76, %vm94
    %vm111 = vmand %vm77, %vm95
    %vm112 = vmand %vm78, %vm96
    %vm113 = vmand %vm79, %vm97
    %vm114 = vmand %vm80, %vm98
    %vm115 = vmand %vm81, %vm99
    %vm116 = vmand %vm82, %vm100
    %vm117 = vmand %vm83, %vm101
    %vm118 = vmand %vm84, %vm102
    %vm119 = vmand %vm85, %vm103
    %vm120 = vmand %vm86, %vm104
    %vm121 = vmand %vm87, %vm105
    %vm122 = vmand %vm88, %vm106
    %v123 = vsel %vm107, 1, 0
    %v124 = vsel %vm108, 1, 0
    %v125 = vsel %vm109, 1, 0
    %v126 = vsel %vm110, 1, 0
    %v127 = vsel %vm111, 1, 0
    %v128 = vsel %vm112, 1, 0
    %v129 = vsel %vm113, 1, 0
    %v130 = vsel %vm114, 1, 0
    %v131 = vsel %vm115, 1, 0
    %v132 = vsel %vm116, 1, 0
    %v133 = vsel %vm117, 1, 0
    %v134 = vsel %vm118, 1, 0
    %v135 = vsel %vm119, 1, 0
    %v136 = vsel %vm120, 1, 0
    %v137 = vsel %vm121, 1, 0
    %v138 = vsel %vm122, 1, 0
    %v139 = vcvt.s32.f32 %v123
    %v140 = vcvt.s32.f32 %v124
    %v141 = vcvt.s32.f32 %v125
    %v142 = vcvt.s32.f32 %v126
    %v143 = vcvt.s32.f32 %v127
    %v144 = vcvt.s32.f32 %v128
    %v145 = vcvt.s32.f32 %v129
    %v146 = vcvt.s32.f32 %v130
    %v147 = vcvt.s32.f32 %v131
    %v148 = vcvt.s32.f32 %v132
    %v149 = vcvt.s32.f32 %v133
    %v150 = vcvt.s32.f32 %v134
    %v151 = vcvt.s32.f32 %v135
    %v152 = vcvt.s32.f32 %v136
    %v153 = vcvt.s32.f32 %v137
    %v154 = vcvt.s32.f32 %v138
    %v155 = vmul.u32 %v40, 32
    %vm156 = vcmp.ge.s32.totalorder %v55, %v155
    %v157 = vadd.s32 %v40, 1
    %v158 = vmul.u32 %v157, 32
    %vm159 = vcmp.lt.s32.totalorder %v55, %v158
    %vm160 = vmand %vm156, %vm159
    %v161 = vsel %vm160, 1, 0
    %v162 = vcvt.s32.f32 %v161
    %163 = vmatprep.subr.mxu0 0.0
    %164 = vmatpush1.msra.mxu0 %v154
    %165 = vmatprep.subr.mxu0 0.0
    %166 = vmatpush1.msra.mxu0 %v153
    %167 = vmatprep.subr.mxu0 0.0
    %168 = vmatpush1.msra.mxu0 %v152
    %169 = vmatprep.subr.mxu0 0.0
    %170 = vmatpush1.msra.mxu0 %v151
    %171 = vmatprep.subr.mxu0 0.0
    %172 = vmatpush1.msra.mxu0 %v150
    %173 = vmatprep.subr.mxu0 0.0
    %174 = vmatpush1.msra.mxu0 %v149
    %175 = vmatprep.subr.mxu0 0.0
    %176 = vmatpush1.msra.mxu0 %v148
    %177 = vmatprep.subr.mxu0 0.0
    %178 = vmatpush1.msra.mxu0 %v147
    %179 = vmatprep.subr.mxu0 0.0
    %180 = vmatpush1.msra.mxu0 %v146
    %181 = vmatprep.subr.mxu0 0.0
    %182 = vmatpush1.msra.mxu0 %v145
    %183 = vmatprep.subr.mxu0 0.0
    %184 = vmatpush1.msra.mxu0 %v144
    %185 = vmatprep.subr.mxu0 0.0
    %186 = vmatpush1.msra.mxu0 %v143
    %187 = vmatprep.subr.mxu0 0.0
    %188 = vmatpush1.msra.mxu0 %v142
    %189 = vmatprep.subr.mxu0 0.0
    %190 = vmatpush1.msra.mxu0 %v141
    %191 = vmatprep.subr.mxu0 0.0
    %192 = vmatpush1.msra.mxu0 %v140
    %193 = vmatprep.subr.mxu0 0.0
    %194 = vmatpush1.msra.mxu0 %v139
    %195 = vmatprep.subr.mxu0 0.0
    %196 = vmatpush2.msra.mxu0 0.0
    %197 = vmatprep.subr.mxu0 0.0
    %198 = vmatpush2.msra.mxu0 0.0
    %199 = vmatprep.subr.mxu0 0.0
    %200 = vmatpush2.msra.mxu0 0.0
    %201 = vmatprep.subr.mxu0 0.0
    %202 = vmatpush2.msra.mxu0 0.0
    %203 = vmatprep.subr.mxu0 0.0
    %204 = vmatpush2.msra.mxu0 0.0
    %205 = vmatprep.subr.mxu0 0.0
    %206 = vmatpush2.msra.mxu0 0.0
    %207 = vmatprep.subr.mxu0 0.0
    %208 = vmatpush2.msra.mxu0 0.0
    %209 = vmatprep.subr.mxu0 0.0
    %210 = vmatpush2.msra.mxu0 0.0
    %211 = vmatprep.subr.mxu0 0.0
    %212 = vmatpush2.msra.mxu0 0.0
    %213 = vmatprep.subr.mxu0 0.0
    %214 = vmatpush2.msra.mxu0 0.0
    %215 = vmatprep.subr.mxu0 0.0
    %216 = vmatpush2.msra.mxu0 0.0
    %217 = vmatprep.subr.mxu0 0.0
    %218 = vmatpush2.msra.mxu0 0.0
    %219 = vmatprep.subr.mxu0 0.0
    %220 = vmatpush2.msra.mxu0 0.0
    %221 = vmatprep.subr.mxu0 0.0
    %222 = vmatpush2.msra.mxu0 0.0
    %223 = vmatprep.subr.mxu0 0.0
    %224 = vmatpush2.msra.mxu0 0.0
    %225 = vmatprep.subr.mxu0 0.0
    %226 = vmatpush2.msra.mxu0 0.0
    %227 = vmatprep.mubr.f32.mxu0 0.0
    %228 = vmatmul.mubr.f32.gmra.mxu0 %v53
    %v229 = vpop.f32.mrf.mxu0
    %v230 = vadd.f32 0.0, %v229
    %v231 = vpop.f32.mrf.mxu0
    %232 = vdwg.mxu0
    %v233 = vadd.s32 %v37, %v72
    %v234 = vcvt.s32.f32 %v233
    %vm235 = vcmask 31744
    %v237 = vsel %vm235, %v234, 0
    %v240 = vsel %vm47, %v162, 0
    %242 = vmatprep.subr.mxu0 0.0
    %243 = vmatpush1.msra.mxu0 0.0
    %244 = vmatprep.subr.mxu0 0.0
    %245 = vmatpush1.msra.mxu0 0.0
    %246 = vmatprep.subr.mxu0 0.0
    %247 = vmatpush1.msra.mxu0 0.0
    %248 = vmatprep.subr.mxu0 0.0
    %249 = vmatpush1.msra.mxu0 0.0
    %250 = vmatprep.subr.mxu0 0.0
    %251 = vmatpush1.msra.mxu0 0.0
    %252 = vmatprep.subr.mxu0 0.0
    %253 = vmatpush1.msra.mxu0 0.0
    %254 = vmatprep.subr.mxu0 0.0
    %255 = vmatpush1.msra.mxu0 0.0
    %256 = vmatprep.subr.mxu0 0.0
    %257 = vmatpush1.msra.mxu0 0.0
    %258 = vmatprep.subr.mxu0 0.0
    %259 = vmatpush1.msra.mxu0 0.0
    %260 = vmatprep.subr.mxu0 0.0
    %261 = vmatpush1.msra.mxu0 0.0
    %262 = vmatprep.subr.mxu0 0.0
    %263 = vmatpush1.msra.mxu0 0.0
    %264 = vmatprep.subr.mxu0 0.0
    %265 = vmatpush1.msra.mxu0 0.0
    %266 = vmatprep.subr.mxu0 0.0
    %267 = vmatpush1.msra.mxu0 0.0
    %268 = vmatprep.subr.mxu0 0.0
    %269 = vmatpush1.msra.mxu0 0.0
    %270 = vmatprep.subr.mxu0 0.0
    %271 = vmatpush1.msra.mxu0 0.0
    %272 = vmatprep.subr.mxu0 0.0
    %273 = vmatpush1.msra.mxu0 %v240
    %274 = vmatprep.subr.mxu0 0.0
    %275 = vmatpush2.msra.mxu0 0.0
    %276 = vmatprep.subr.mxu0 0.0
    %277 = vmatpush2.msra.mxu0 0.0
    %278 = vmatprep.subr.mxu0 0.0
    %279 = vmatpush2.msra.mxu0 0.0
    %280 = vmatprep.subr.mxu0 0.0
    %281 = vmatpush2.msra.mxu0 0.0
    %282 = vmatprep.subr.mxu0 0.0
    %283 = vmatpush2.msra.mxu0 0.0
    %284 = vmatprep.subr.mxu0 0.0
    %285 = vmatpush2.msra.mxu0 0.0
    %286 = vmatprep.subr.mxu0 0.0
    %287 = vmatpush2.msra.mxu0 0.0
    %288 = vmatprep.subr.mxu0 0.0
    %289 = vmatpush2.msra.mxu0 0.0
    %290 = vmatprep.subr.mxu0 0.0
    %291 = vmatpush2.msra.mxu0 0.0
    %292 = vmatprep.subr.mxu0 0.0
    %293 = vmatpush2.msra.mxu0 0.0
    %294 = vmatprep.subr.mxu0 0.0
    %295 = vmatpush2.msra.mxu0 0.0
    %296 = vmatprep.subr.mxu0 0.0
    %297 = vmatpush2.msra.mxu0 0.0
    %298 = vmatprep.subr.mxu0 0.0
    %299 = vmatpush2.msra.mxu0 0.0
    %300 = vmatprep.subr.mxu0 0.0
    %301 = vmatpush2.msra.mxu0 0.0
    %302 = vmatprep.subr.mxu0 0.0
    %303 = vmatpush2.msra.mxu0 0.0
    %304 = vmatprep.subr.mxu0 0.0
    %305 = vmatpush2.msra.mxu0 0.0
    %306 = vmatprep.mubr.f32.mxu0 0.0
    %307 = vmatmul.mubr.f32.gmra.mxu0 %v237
    %v308 = vpop.f32.mrf.mxu0
    %v309 = vadd.f32 0.0, %v308
    %v310 = vpop.f32.mrf.mxu0
    %311 = vdwg.mxu0
    %v312 = vlog2.pop %v230
    %v313 = vmul.f32 %v312, 0.6931472
    %v314 = vadd.f32 %v50, %v313
    %v315 = vsel %vm45, %v314, 0.0
    %vm316 = vcmask 27648
    %v317 = vsel %vm316, %v315, 0.0
    %318 = vadd.xlane.f32.xlu0 %v317
    %v319 = vpop.xlane.xlu0 %318
    %v320 = vrot.slane %v319, 4
    %v321 = vadd.f32 %v319, %v320
    %v322 = vrot.slane %v321, 2
    %v323 = vadd.f32 %v321, %v322
    %v324 = vrot.slane %v323, 1
    %v325 = vadd.f32 %v323, %v324
    %s326 = vtos %v325
    %vm327 = vcmp.eq.f32.partialorder %v56, %v309
    %v328 = vsel %vm327, %v46, 0.0
    %v329 = vsel %vm47, %v328, 0.0
    %330 = vadd.xlane.f32.xlu0 %v329
    %v331 = vpop.xlane.xlu0 %330
    %v332 = vrot.slane %v331, 4
    %v333 = vadd.f32 %v331, %v332
    %v334 = vrot.slane %v333, 2
    %v335 = vadd.f32 %v333, %v334
    %v336 = vrot.slane %v335, 1
    %v337 = vadd.f32 %v335, %v336
    %s338 = vtos %v337
    %s339 = ssub.f32 %s326, %s338
    %vm340 = vcmp.eq.s32.totalorder %v40, 0
    %vm341 = vcmp.eq.s32.totalorder %v55, 0
    %vm342 = vmand %vm340, %vm341
    %v343 = vstv %s339
    %v344 = vsel %vm342, %v343, 0.0
    %345 = vst [vmem:[#allocation7] sm:$0xff] %v344
    // Predicated region
    $region18: #{tpu_custom_call.1} parent=1 // pred_check
      _
    $region19: #{tpu_custom_call.1} parent=1 // pred_check_branch
      %347 = sbr.rel (0) target = $region21
    $region20: #{tpu_custom_call.1} parent=1 // pred_region
      %s349 = ssub.s32 128, 128
      %350 = vsyncadd [#allocation4], %s349
      %s352 = sshll.u32 [#allocation7], 4
      %s353 = int_to_ptr.vmem [resolvable:$true] %s352
      %355 = dma.vmem_to_hbm [thread:$0]  %s353, 128, %s2, [#allocation4]
    $region21: #{tpu_custom_call.1} parent=1 // pred_fallthru
      _
    // Predicated region
    $region22: #{tpu_custom_call.1} parent=1 // pred_check
      _
    $region23: #{tpu_custom_call.1} parent=1 // pred_check_branch
      %357 = sbr.rel (0) target = $region25
    $region24: #{tpu_custom_call.1} parent=1 // pred_region
      %358 = dma.done [#allocation4], 128
    $region25: #{tpu_custom_call.1} parent=1 // pred_fallthru
      _
    %359 = vsyncpa [#allocation3], 1
    %360 = vsyncpa [#allocation6], 1
    %361 = vsyncpa [#allocation4], 1

</llo_original>
